<compile_context>
chip_gen: v7x
topology: tpu7x:2x2x1
jax: 0.10.0
libtpu: 0.0.40
codegen_flags: <defaults>
</compile_context>

<pallas_src>
import jax
import jax.numpy as jnp
from jax import lax
from jax.experimental import pallas as pl
from jax.experimental.pallas import tpu as pltpu


def _frozen_bn_kernel(scale_ref, shift_ref, x_ref, o_ref):
    # scale/shift refs: (tc, 1) float32; x/o refs: (nb, tc, tl) activation dtype.
    x = x_ref[...].astype(jnp.float32)
    y = x * scale_ref[...] + shift_ref[...]          # (tc,1) broadcasts over (nb,tc,tl)
    o_ref[...] = y.astype(o_ref.dtype)


def _round_up(v, m):
    return ((v + m - 1) // m) * m


def _largest_divisor_leq(n, cap):
    cap = max(1, min(n, cap))
    for d in range(cap, 0, -1):
        if n % d == 0:
            return d
    return 1


def frozen_batchnorm2d(x, weight, bias, running_mean, running_var, *,
                       block_bytes=4 << 20):
    """x: (N, C, H, W).  weight/bias/running_mean/running_var: (C,)."""
    N, C, H, W = x.shape
    L = H * W
    itemsize = jnp.dtype(x.dtype).itemsize

    # Free, contiguous view: channels -> sublanes, flattened spatial -> lanes.
    xr = x.reshape(N, C, L)

    # Fold the frozen buffers once (O(C)); keep in float32 (no eps, per spec).
    scale32 = weight.astype(jnp.float32) * lax.rsqrt(running_var.astype(jnp.float32))
    shift32 = bias.astype(jnp.float32) - running_mean.astype(jnp.float32) * scale32
    scale = scale32.reshape(C, 1)
    shift = shift32.reshape(C, 1)

    # ---- Channel tiling: VMEM safety valve for very large C. --------------
    if C * 128 * itemsize <= block_bytes:
        tc = C
    else:
        tc = max(8, (block_bytes // (128 * itemsize)) // 8 * 8)
    n_c = pl.cdiv(C, tc)

    # ---- Balanced lane tiling under the byte budget. -----------------------
    budget_lanes = max(128, (block_bytes // max(1, tc * itemsize)) // 128 * 128)
    if L <= budget_lanes:
        tl, n_l = L, 1
    else:
        n_l = pl.cdiv(L, budget_lanes)
        tl = _round_up(pl.cdiv(L, n_l), 128)
        n_l = pl.cdiv(L, tl)

    # ---- Batch packing for small feature maps (amortize grid-step cost). ---
    slab_bytes = max(1, tc * tl * itemsize)
    nb = _largest_divisor_leq(N, block_bytes // slab_bytes)
    n_b = N // nb

    # ---- Megacore (v7x): make sure both TensorCores get work. --------------
    if n_b * n_c * n_l < 2:
        if tl >= 1024:                           # split lanes (>=512, x128)
            tl = _round_up(pl.cdiv(L, 2), 128)
            n_l = pl.cdiv(L, tl)
        elif nb >= 2:                            # else split the batch packing
            nb = _largest_divisor_leq(N, max(1, nb // 2))
            n_b = N // nb

    out = pl.pallas_call(
        _frozen_bn_kernel,
        out_shape=jax.ShapeDtypeStruct((N, C, L), x.dtype),
        grid=(n_b, n_c, n_l),
        in_specs=[
            pl.BlockSpec((tc, 1), lambda b, c, l: (c, 0)),           # scale (f32)
            pl.BlockSpec((tc, 1), lambda b, c, l: (c, 0)),           # shift (f32)
            pl.BlockSpec((nb, tc, tl), lambda b, c, l: (b, c, l)),   # x tile
        ],
        out_specs=pl.BlockSpec((nb, tc, tl), lambda b, c, l: (b, c, l)),
        compiler_params=pltpu.CompilerParams(
            dimension_semantics=("parallel", "parallel", "parallel"),
            vmem_limit_bytes=32 << 20,
        ),
        cost_estimate=pl.CostEstimate(
            flops=2 * x.size,
            transcendentals=0,
            bytes_accessed=2 * x.size * itemsize + 2 * C * 4,
        ),
    )(scale, shift, xr)

    # Free view back to NCHW -- no transpose, no extra HBM pass.
    return out.reshape(N, C, H, W)


def _reference(x, weight, bias, running_mean, running_var):
    scale = weight * lax.rsqrt(running_var)
    b = bias - running_mean * scale
    return x * scale.reshape(1, -1, 1, 1) + b.reshape(1, -1, 1, 1)


if __name__ == "__main__":
    key = jax.random.PRNGKey(0)
    kx, kw, kb, km, kv = jax.random.split(key, 5)

    N, C, H, W = 2, 4, 16, 16
    x = jax.random.normal(kx, (N, C, H, W), dtype=jnp.float32)

    # Deterministic, non-trivial frozen buffers (shapes per module __init__: (C,)).
    weight = jax.random.uniform(kw, (C,), minval=0.5, maxval=1.5)
    bias = jax.random.normal(kb, (C,)) * 0.1
    running_mean = jax.random.normal(km, (C,)) * 0.2
    running_var = jax.random.uniform(kv, (C,), minval=0.5, maxval=2.0)

    y = frozen_batchnorm2d(x, weight, bias, running_mean, running_var)
    y = jax.block_until_ready(y)

    y_ref = _reference(x, weight, bias, running_mean, running_var)
    assert y.shape == x.shape and y.dtype == x.dtype
    assert jnp.allclose(y, y_ref, atol=1e-5, rtol=1e-5)

    print("KERNEL_OK")
</pallas_src>

<mosaic_0001>
module attributes {stable_mosaic.version = 11 : i64} {
  func.func @_frozen_bn_kernel(%arg0: i32, %arg1: i32, %arg2: i32, %arg3: memref<4x1xf32, #tpu.memory_space<vmem>>, %arg4: memref<4x1xf32, #tpu.memory_space<vmem>>, %arg5: memref<1x4x256xf32, #tpu.memory_space<vmem>>, %arg6: memref<1x4x256xf32, #tpu.memory_space<vmem>>) attributes {dimension_semantics = [#tpu.dimension_semantics<parallel>, #tpu.dimension_semantics<parallel>, #tpu.dimension_semantics<parallel>], iteration_bounds = array<i64: 2, 1, 1>, scalar_prefetch = 0 : i64, scratch_operands = 0 : i64, tpu.core_type = #tpu.core_type<tc>, window_params = [{transform_indices = @transform_0, window_bounds = array<i64: 4, 1>}, {transform_indices = @transform_1, window_bounds = array<i64: 4, 1>}, {transform_indices = @transform_2, window_bounds = array<i64: 1, 4, 256>}, {transform_indices = @transform_3, window_bounds = array<i64: 1, 4, 256>}]} {
    %c0 = arith.constant 0 : index
    %c0_0 = arith.constant 0 : index
    %c0_1 = arith.constant 0 : index
    %0 = vector.load %arg5[%c0, %c0_0, %c0_1] : memref<1x4x256xf32, #tpu.memory_space<vmem>>, vector<1x4x256xf32>
    %c0_2 = arith.constant 0 : index
    %c0_3 = arith.constant 0 : index
    %1 = vector.load %arg3[%c0_2, %c0_3] : memref<4x1xf32, #tpu.memory_space<vmem>>, vector<4x1xf32>
    %2 = vector.shape_cast %1 : vector<4x1xf32> to vector<1x4x1xf32>
    %3 = vector.broadcast %2 : vector<1x4x1xf32> to vector<1x4x256xf32>
    %4 = arith.mulf %0, %3 : vector<1x4x256xf32>
    %c0_4 = arith.constant 0 : index
    %c0_5 = arith.constant 0 : index
    %5 = vector.load %arg4[%c0_4, %c0_5] : memref<4x1xf32, #tpu.memory_space<vmem>>, vector<4x1xf32>
    %6 = vector.shape_cast %5 : vector<4x1xf32> to vector<1x4x1xf32>
    %7 = vector.broadcast %6 : vector<1x4x1xf32> to vector<1x4x256xf32>
    %8 = arith.addf %4, %7 : vector<1x4x256xf32>
    %c0_6 = arith.constant 0 : index
    %c0_7 = arith.constant 0 : index
    %c0_8 = arith.constant 0 : index
    %9 = vector.load %arg6[%c0_6, %c0_7, %c0_8] : memref<1x4x256xf32, #tpu.memory_space<vmem>>, vector<1x4x256xf32>
    tpu.vector_store %arg6[%c0_6, %c0_7, %c0_8], %8 {strides = array<i32>} : memref<1x4x256xf32, #tpu.memory_space<vmem>>, vector<1x4x256xf32>,
    return
  }
  func.func @transform_0(%arg0: i32, %arg1: i32, %arg2: i32) -> (i32, i32) {
    %c0_i32 = arith.constant 0 : i32
    %c0_i32_0 = arith.constant 0 : i32
    return %arg1, %c0_i32 : i32, i32
  }
  func.func @transform_1(%arg0: i32, %arg1: i32, %arg2: i32) -> (i32, i32) {
    %c0_i32 = arith.constant 0 : i32
    %c0_i32_0 = arith.constant 0 : i32
    return %arg1, %c0_i32 : i32, i32
  }
  func.func @transform_2(%arg0: i32, %arg1: i32, %arg2: i32) -> (i32, i32, i32) {
    %c0_i32 = arith.constant 0 : i32
    return %arg0, %arg1, %arg2 : i32, i32, i32
  }
  func.func @transform_3(%arg0: i32, %arg1: i32, %arg2: i32) -> (i32, i32, i32) {
    %c0_i32 = arith.constant 0 : i32
    return %arg0, %arg1, %arg2 : i32, i32, i32
  }
}

</mosaic_0001>

<llo_original>
// kernel: tpu_custom_call.1
$region0: #{tpu_custom_call.1}
  #allocation0 [shape = 'u32[]', space=smem, size = 0x4, offset = 0x4, fixed_abs, tag = 'smem constant byte address 0x4 - core index']
  #allocation1 [shape = 'u32[144,128]{1,0:T(1,128)}', space=vmem, size = 0x12000, scoped, tag = 'internal scratch']
  %s0 = inlined_call_operand.vmem [shape: f32[4,1], index: 0, kind: input, shape index: {}]
  %s1 = inlined_call_operand.vmem [shape: f32[4,1], index: 1, kind: input, shape index: {}]
  %s2 = inlined_call_operand.vmem [shape: f32[2,4,256], index: 2, kind: input, shape index: {}]
  %s3 = inlined_call_operand.hbm [shape: f32[2,4,256], index: 3, kind: output, shape index: {}]
  %s4 = sld [smem:[#allocation0]]
  $region45: #{tpu_custom_call.1} parent=0
    _
  %s6 = ssub.s32 1, %s4
  %s7 = scalar_select 0, %s6, %s4
  $region1: #{tpu_custom_call.1} parent=0
    #allocation2 [shape = 'u8[8192]{0}', space=vmem, size = 0x2000, scoped, tag = 'output window, operand 0']
    #allocation3 [shape = 's32[2]{0}', space=sflag, size = 0x8, scoped, tag = 'scoped memory for tpu_custom_call.1']
    %8 = vsyncpa [#allocation3], 0
    %s9 = scalar_lea.sflag [#allocation3], 1
    %10 = vsyncpa %s9, 0
    loop: start=0, step=1, limit=4
    $region2: #{tpu_custom_call.1} parent=1 // loop_pre_header
      _
    $region3: #{tpu_custom_call.1} parent=1 // loop_header
      %s12 = sphi 0, %s16
      %p13 = scmp.ge.s32.totalorder %s12, 4
      %s19 = sphi 0, %s38
      %s20 = sphi 0, %s34
      %s21 = sphi 0, %s30
      %s22 = sphi 0, %s19
      %s23 = sphi 0, %s20
      %s24 = sphi 0, %s21
      %s25 = sphi 0, %s22
      %s26 = sphi 0, %s23
      %s27 = sphi 0, %s24
      %s41 = sphi 0, %s43
      %s44 = sphi 0, %s41
      %s45 = sphi 0, %s44
      %s61 = sphi 0, %s45
      %s67 = sphi 0, %s69
      %s70 = sphi 0, %s67
      %s71 = sphi 0, %s70
      %s87 = sphi 0, %s71
      %s97 = sphi 0, %s99
      %s100 = sphi 0, %s97
      %s101 = sphi 0, %s100
      %s117 = sphi 0, %s101
      %s127 = sphi 0, %s129
      %s130 = sphi 0, %s127
      %s131 = sphi 0, %s130
      %s147 = sphi 0, %s131
    $region4: #{tpu_custom_call.1} parent=1 // loop_header_branch
      %15 = sbr.rel (%p13) target = $region8
    $region5: #{tpu_custom_call.1} parent=1 // loop_body
      %s17 = ssub.s32 %s12, 1
      %s18 = ssub.s32 %s12, 2
      %s28 = sadd.s32 1, %s21
      %p29 = scmp.ge.s32.totalorder %s28, 1
      %s30 = scalar_select %p29, 0, %s28
      %s31 = sadd.s32 1, %s20
      %s32 = scalar_select %p29, %s31, %s20
      %p33 = scmp.ge.s32.totalorder %s32, 1
      %s34 = scalar_select %p33, 0, %s32
      %s35 = sadd.s32 1, %s19
      %s36 = scalar_select %p33, %s35, %s19
      %p37 = scmp.ge.s32.totalorder %s36, 2
      %s38 = scalar_select %p37, 0, %s36
      %s39 = ssub.s32 %s20, %s34
      %p40 = scmp.eq.s32.totalorder %s39, 0
      %s42 = sadd.s32 %s41, 1
      %s43 = scalar_select %p40, %s41, %s42
      %p46 = pneg %p40
      %p47 = scmp.eq.s32.totalorder %s12, 1
      %p48 = por %p46, %p47
      %p49 = scmp.ne.s32.totalorder %s41, %s44
      %p50 = scmp.eq.s32.totalorder %s12, 0
      %p51 = por %p49, %p50
      %p52 = scmp.ne.s32.totalorder %s41, %s44
      %p53 = scmp.eq.s32.totalorder %s17, 1
      %p54 = por %p52, %p53
      %p55 = scmp.ne.s32.totalorder %s44, %s45
      %p56 = scmp.eq.s32.totalorder %s17, 0
      %p57 = por %p55, %p56
      %p58 = scmp.ne.s32.totalorder %s44, %s45
      %p59 = scmp.eq.s32.totalorder %s18, 1
      %p60 = por %p58, %p59
      %p62 = scmp.ne.s32.totalorder %s45, %s61
      %p63 = scmp.eq.s32.totalorder %s18, 0
      %p64 = por %p62, %p63
      %s65 = ssub.s32 %s20, %s34
      %p66 = scmp.eq.s32.totalorder %s65, 0
      %s68 = sadd.s32 %s67, 1
      %s69 = scalar_select %p66, %s67, %s68
      %p72 = pneg %p66
      %p73 = scmp.eq.s32.totalorder %s12, 1
      %p74 = por %p72, %p73
      %p75 = scmp.ne.s32.totalorder %s67, %s70
      %p76 = scmp.eq.s32.totalorder %s12, 0
      %p77 = por %p75, %p76
      %p78 = scmp.ne.s32.totalorder %s67, %s70
      %p79 = scmp.eq.s32.totalorder %s17, 1
      %p80 = por %p78, %p79
      %p81 = scmp.ne.s32.totalorder %s70, %s71
      %p82 = scmp.eq.s32.totalorder %s17, 0
      %p83 = por %p81, %p82
      %p84 = scmp.ne.s32.totalorder %s70, %s71
      %p85 = scmp.eq.s32.totalorder %s18, 1
      %p86 = por %p84, %p85
      %p88 = scmp.ne.s32.totalorder %s71, %s87
      %p89 = scmp.eq.s32.totalorder %s18, 0
      %p90 = por %p88, %p89
      %s91 = ssub.s32 %s19, %s38
      %s92 = ssub.s32 %s20, %s34
      %s93 = sor.u32 %s91, %s92
      %s94 = ssub.s32 %s21, %s30
      %s95 = sor.u32 %s93, %s94
      %p96 = scmp.eq.s32.totalorder %s95, 0
      %s98 = sadd.s32 %s97, 1
      %s99 = scalar_select %p96, %s97, %s98
      %p102 = pneg %p96
      %p103 = scmp.eq.s32.totalorder %s12, 1
      %p104 = por %p102, %p103
      %p105 = scmp.ne.s32.totalorder %s97, %s100
      %p106 = scmp.eq.s32.totalorder %s12, 0
      %p107 = por %p105, %p106
      %p108 = scmp.ne.s32.totalorder %s97, %s100
      %p109 = scmp.eq.s32.totalorder %s17, 1
      %p110 = por %p108, %p109
      %p111 = scmp.ne.s32.totalorder %s100, %s101
      %p112 = scmp.eq.s32.totalorder %s17, 0
      %p113 = por %p111, %p112
      %p114 = scmp.ne.s32.totalorder %s100, %s101
      %p115 = scmp.eq.s32.totalorder %s18, 1
      %p116 = por %p114, %p115
      %p118 = scmp.ne.s32.totalorder %s101, %s117
      %p119 = scmp.eq.s32.totalorder %s18, 0
      %p120 = por %p118, %p119
      %s121 = ssub.s32 %s19, %s38
      %s122 = ssub.s32 %s20, %s34
      %s123 = sor.u32 %s121, %s122
      %s124 = ssub.s32 %s21, %s30
      %s125 = sor.u32 %s123, %s124
      %p126 = scmp.eq.s32.totalorder %s125, 0
      %s128 = sadd.s32 %s127, 1
      %s129 = scalar_select %p126, %s127, %s128
      %p132 = pneg %p126
      %p133 = scmp.eq.s32.totalorder %s12, 1
      %p134 = por %p132, %p133
      %p135 = scmp.ne.s32.totalorder %s127, %s130
      %p136 = scmp.eq.s32.totalorder %s12, 0
      %p137 = por %p135, %p136
      %p138 = scmp.ne.s32.totalorder %s127, %s130
      %p139 = scmp.eq.s32.totalorder %s17, 1
      %p140 = por %p138, %p139
      %p141 = scmp.ne.s32.totalorder %s130, %s131
      %p142 = scmp.eq.s32.totalorder %s17, 0
      %p143 = por %p141, %p142
      %p144 = scmp.ne.s32.totalorder %s130, %s131
      %p145 = scmp.eq.s32.totalorder %s18, 1
      %p146 = por %p144, %p145
      %p148 = scmp.ne.s32.totalorder %s131, %s147
      %p149 = scmp.eq.s32.totalorder %s18, 0
      %p150 = por %p148, %p149
      %p151 = scmp.le.s32.totalorder 1, %s12
      %p152 = scmp.lt.s32.totalorder %s12, 3
      %p153 = pnand %p151, %p152
      %p154 = pneg %p153
      // Predicated region
      $region9: #{tpu_custom_call.1} parent=5 // pred_check
        _
      $region10: #{tpu_custom_call.1} parent=5 // pred_check_branch
        %156 = sbr.rel (%p153) target = $region12
      $region11: #{tpu_custom_call.1} parent=5 // pred_region
        %s157 = ssub.s32 %s12, 1
        // Predicated region
        $region13: #{tpu_custom_call.1} parent=11 // pred_check
          %p158 = pneg %p57
        $region14: #{tpu_custom_call.1} parent=11 // pred_check_branch
          %160 = sbr.rel (%p158) target = $region16
        $region15: #{tpu_custom_call.1} parent=11 // pred_region
          %p161 = scmp.lt.s32.totalorder %s23, 0
          %s162 = scalar_select %p161, %s23, 0
          %s163 = smul.addr %s162, 4
          %s164 = scalar_lea.vmem %s0, %s163
        $region16: #{tpu_custom_call.1} parent=11 // pred_fallthru
          _
        // Predicated region
        $region17: #{tpu_custom_call.1} parent=11 // pred_check
          %p165 = pneg %p83
        $region18: #{tpu_custom_call.1} parent=11 // pred_check_branch
          %167 = sbr.rel (%p165) target = $region20
        $region19: #{tpu_custom_call.1} parent=11 // pred_region
          %p168 = scmp.lt.s32.totalorder %s23, 0
          %s169 = scalar_select %p168, %s23, 0
          %s170 = smul.addr %s169, 4
          %s171 = scalar_lea.vmem %s1, %s170
        $region20: #{tpu_custom_call.1} parent=11 // pred_fallthru
          _
      $region12: #{tpu_custom_call.1} parent=5 // pred_fallthru
        _
      %p172 = scmp.lt.s32.totalorder %s12, 2
      // Predicated region
      $region21: #{tpu_custom_call.1} parent=5 // pred_check
        %p173 = pneg %p172
      $region22: #{tpu_custom_call.1} parent=5 // pred_check_branch
        %175 = sbr.rel (%p173) target = $region24
      $region23: #{tpu_custom_call.1} parent=5 // pred_region
        // Predicated region
        $region25: #{tpu_custom_call.1} parent=23 // pred_check
          %p176 = pneg %p107
        $region26: #{tpu_custom_call.1} parent=23 // pred_check_branch
          %178 = sbr.rel (%p176) target = $region28
        $region27: #{tpu_custom_call.1} parent=23 // pred_region
          %s179 = smul.u32 2, %s21
          %p180 = scmp.lt.s32.totalorder %s19, 1
          %s181 = scalar_select %p180, %s19, 1
          %p182 = scmp.lt.s32.totalorder %s20, 0
          %s183 = scalar_select %p182, %s20, 0
          %p184 = scmp.lt.s32.totalorder %s179, 1
          %s185 = scalar_select %p184, %s179, 1
          %s186 = smul.addr %s183, 2
          %s187 = sadd.s32 %s185, %s186
          %s188 = smul.addr %s181, 2
          %s189 = sadd.s32 %s187, %s188
          %s190 = smul.addr %s189, 4
          %s191 = scalar_lea.vmem %s2, %s190
          %s192 = smul.u32 2, %s21
        $region28: #{tpu_custom_call.1} parent=23 // pred_fallthru
          _
      $region24: #{tpu_custom_call.1} parent=5 // pred_fallthru
        _
      %p193 = scmp.le.s32.totalorder 1, %s12
      %p194 = scmp.lt.s32.totalorder %s12, 3
      %p195 = pnand %p193, %p194
      %p196 = pneg %p195
      // Predicated region
      $region29: #{tpu_custom_call.1} parent=5 // pred_check
        _
      $region30: #{tpu_custom_call.1} parent=5 // pred_check_branch
        %198 = sbr.rel (%p195) target = $region32
      $region31: #{tpu_custom_call.1} parent=5 // pred_region
        %s199 = ssub.s32 %s12, 1
        %p200 = scmp.lt.s32.totalorder %s23, 0
        %s201 = scalar_select %p200, %s23, 0
        %s202 = smul.addr %s201, 4
        %s203 = scalar_lea.vmem %s0, %s202
        %p204 = pneg %p57
        %p205 = pneg %p54
        %p206 = scmp.lt.s32.totalorder %s23, 0
        %s207 = scalar_select %p206, %s23, 0
        %s208 = smul.addr %s207, 4
        %s209 = scalar_lea.vmem %s1, %s208
        %p210 = pneg %p83
        %p211 = pneg %p80
        %s212 = smul.u32 2, %s24
        %p213 = scmp.lt.s32.totalorder %s22, 1
        %s214 = scalar_select %p213, %s22, 1
        %p215 = scmp.lt.s32.totalorder %s23, 0
        %s216 = scalar_select %p215, %s23, 0
        %p217 = scmp.lt.s32.totalorder %s212, 1
        %s218 = scalar_select %p217, %s212, 1
        %s219 = smul.addr %s216, 2
        %s220 = sadd.s32 %s218, %s219
        %s221 = smul.addr %s214, 2
        %s222 = sadd.s32 %s220, %s221
        %s223 = smul.addr %s222, 4
        %s224 = scalar_lea.vmem %s2, %s223
        %p225 = pneg %p113
        %p226 = pneg %p110
        %p227 = pneg %p143
        %p228 = pneg %p140
        %s229 = sand.u32 %s130, 1
        %s230 = scalar_lea.sflag [#allocation3], %s229
        %s231 = sand.u32 %s130, 1
        %s232 = smul.addr %s231, 8
        %s233 = scalar_lea.vmem [#allocation2], %s232
        %p234 = scmp.lt.s32.totalorder %s23, 0
        %s235 = scalar_select %p234, %s23, 0
        %s236 = smul.addr %s235, 4
        %s237 = scalar_lea.vmem %s0, %s236
        %p238 = scmp.lt.s32.totalorder %s23, 0
        %s239 = scalar_select %p238, %s23, 0
        %s240 = smul.addr %s239, 4
        %s241 = scalar_lea.vmem %s1, %s240
        %s242 = smul.u32 2, %s24
        %p243 = scmp.lt.s32.totalorder %s22, 1
        %s244 = scalar_select %p243, %s22, 1
        %p245 = scmp.lt.s32.totalorder %s23, 0
        %s246 = scalar_select %p245, %s23, 0
        %p247 = scmp.lt.s32.totalorder %s242, 1
        %s248 = scalar_select %p247, %s242, 1
        %s249 = smul.addr %s246, 2
        %s250 = sadd.s32 %s248, %s249
        %s251 = smul.addr %s244, 2
        %s252 = sadd.s32 %s250, %s251
        %s253 = smul.addr %s252, 4
        %s254 = scalar_lea.vmem %s2, %s253
        %s255 = smul.u32 2, %s24
        %s256 = smul.u32 2, %s24
        %v257 = vld [vmem:[%s254] sm:$0xff]
        %v258 = vld [vmem:[%s237] sm:$0xf]
        %260 = vset.pattern.permute.xlu0 0
        %261 = vperm.xlu0 %260, %v258
        %v262 = vpop.permute.xlu0 %261
        %v264 = vunpack.c.l.s4 839922192
        %v265 = vunpack.c.0.s8 %v264
        %v266 = vlaneseq
        %v267 = vshrl.u32 %v266, 7
        %v268 = vsub.s32 %v265, %v267
        %v269 = vrot.slane %v262, %v268
        %v271 = vmul.f32 %v257, %v269
        %v272 = vld [vmem:[%s241] sm:$0xf]
        %274 = vset.pattern.permute.xlu0 0
        %275 = vperm.xlu0 %274, %v272
        %v276 = vpop.permute.xlu0 %275
        %v278 = vunpack.c.l.s4 839922192
        %v279 = vunpack.c.0.s8 %v278
        %v280 = vlaneseq
        %v281 = vshrl.u32 %v280, 7
        %v282 = vsub.s32 %v279, %v281
        %v283 = vrot.slane %v276, %v282
        %v285 = vadd.f32 %v271, %v283
        %286 = vst [vmem:[%s233] sm:$0xff] %v285
        %s287 = sand.u32 %s130, 1
        %s288 = scalar_lea.sflag [#allocation3], %s287
        %s289 = sand.u32 %s130, 1
        %s290 = smul.addr %s289, 8
        %s291 = scalar_lea.vmem [#allocation2], %s290
        // Predicated region
        $region33: #{tpu_custom_call.1} parent=31 // pred_check
          %p292 = pneg %p140
        $region34: #{tpu_custom_call.1} parent=31 // pred_check_branch
          %294 = sbr.rel (%p292) target = $region36
        $region35: #{tpu_custom_call.1} parent=31 // pred_region
          %s295 = smul.u32 2, %s24
          %s297 = ssub.s32 128, 128
          %298 = vsyncadd %s288, %s297
          %s299 = smul.addr %s23, 2
          %s300 = sadd.s32 %s295, %s299
          %s301 = smul.addr %s22, 2
          %s302 = sadd.s32 %s300, %s301
          %s303 = smul.addr %s302, 64
          %s304 = scalar_lea.hbm %s3, %s303
          %s306 = sshll.u32 %s291, 4
          %s307 = int_to_ptr.vmem [resolvable:$true] %s306
          %309 = dma.vmem_to_hbm [thread:$0]  %s307, 128, %s304, %s288
        $region36: #{tpu_custom_call.1} parent=31 // pred_fallthru
          _
      $region32: #{tpu_custom_call.1} parent=5 // pred_fallthru
        _
      %p310 = scmp.le.s32.totalorder 2, %s12
      // Predicated region
      $region37: #{tpu_custom_call.1} parent=5 // pred_check
        %p311 = pneg %p310
      $region38: #{tpu_custom_call.1} parent=5 // pred_check_branch
        %313 = sbr.rel (%p311) target = $region40
      $region39: #{tpu_custom_call.1} parent=5 // pred_region
        %s314 = ssub.s32 %s12, 2
        // Predicated region
        $region41: #{tpu_custom_call.1} parent=39 // pred_check
          %p315 = pneg %p146
        $region42: #{tpu_custom_call.1} parent=39 // pred_check_branch
          %317 = sbr.rel (%p315) target = $region44
        $region43: #{tpu_custom_call.1} parent=39 // pred_region
          %s318 = sand.u32 %s131, 1
          %s319 = scalar_lea.sflag [#allocation3], %s318
          %s320 = sand.u32 %s131, 1
          %s321 = smul.addr %s320, 8
          %s322 = scalar_lea.vmem [#allocation2], %s321
          %323 = dma.done %s319, 128
        $region44: #{tpu_custom_call.1} parent=39 // pred_fallthru
          _
      $region40: #{tpu_custom_call.1} parent=5 // pred_fallthru
        _
    $region6: #{tpu_custom_call.1} parent=1 // loop_footer
      %s16 = sadd.s32 1, %s12
    $region7: #{tpu_custom_call.1} parent=1 // loop_footer_branch
      %11 = sbr.rel target = $region3
    $region8: #{tpu_custom_call.1} parent=1 // loop_exit
      _
    %324 = vsyncpa [#allocation3], 1
    %s325 = scalar_lea.sflag [#allocation3], 1
    %326 = vsyncpa %s325, 1

</llo_original>
